<compile_context>
chip_gen: v6e
topology: v6e:2x2x1
jax: 0.10.0
libtpu: 0.0.40
codegen_flags: <defaults>
</compile_context>

<pallas_src>
import jax
import jax.numpy as jnp
from jax.experimental import pallas as pl
from jax.experimental.pallas import tpu as pltpu


def _round_up(x: int, m: int) -> int:
    return ((x + m - 1) // m) * m


# ----------------------------------------------------------------------------- kernels
def fused_encoder_kernel(x_ref, wf_ref, bf_ref, o_ref):
    """y = x @ Wf + bf  — single MXU pass, f32 accumulate, f32 bias add."""
    y = jnp.dot(x_ref[...], wf_ref[...], preferred_element_type=jnp.float32)
    o_ref[...] = (y + bf_ref[...]).astype(o_ref.dtype)


def twolayer_encoder_kernel(x_ref, w1_ref, b1_ref, w2_ref, b2_ref, o_ref):
    """y = (x @ W1m + b1) @ W2m + b2 — fallback if the real layers have activations."""
    h = jnp.dot(x_ref[...], w1_ref[...], preferred_element_type=jnp.float32)
    h = h + b1_ref[...]
    y = jnp.dot(h.astype(w2_ref.dtype), w2_ref[...],
                preferred_element_type=jnp.float32)
    o_ref[...] = (y + b2_ref[...]).astype(o_ref.dtype)


# ---------------------------------------------------------------------- param prep
def prepare_encoder_params(w1, graph_mask, b1, w2, latent_mask, b2, *,
                           compute_dtype=jnp.bfloat16, fuse_layers=True,
                           lane_multiple=128):
    """One-time parameter preparation (module __init__ analogue).

    Folds the fixed masks into the weights, transposes to (in, out) layout,
    optionally composes the two (activation-free) linear layers into one matrix,
    and zero-pads everything to TPU lane/sublane-friendly shapes.
    """
    HID, IN = w1.shape
    OUT, _ = w2.shape
    IN_p = _round_up(IN, lane_multiple)
    HID_p = _round_up(HID, lane_multiple)
    OUT_p = _round_up(OUT, lane_multiple)

    w1m = (jnp.asarray(w1, jnp.float32) * jnp.asarray(graph_mask, jnp.float32)).T   # (IN, HID)
    w2m = (jnp.asarray(w2, jnp.float32) * jnp.asarray(latent_mask, jnp.float32)).T  # (HID, OUT)
    b1f = jnp.asarray(b1, jnp.float32)
    b2f = jnp.asarray(b2, jnp.float32)

    params = {"dims": (IN, HID, OUT), "compute_dtype": compute_dtype,
              "fused": bool(fuse_layers)}

    if fuse_layers:
        # Compose in f32 (single quantization to compute_dtype afterwards).
        wf = w1m @ w2m                      # (IN, OUT)
        bf = b1f @ w2m + b2f                # (OUT,)
        wfp = jnp.zeros((IN_p, OUT_p), compute_dtype).at[:IN, :OUT].set(
            wf.astype(compute_dtype))
        bfp = jnp.zeros((1, OUT_p), jnp.float32).at[0, :OUT].set(bf)
        params.update(wf=wfp, bf=bfp)
    else:
        w1p = jnp.zeros((IN_p, HID_p), compute_dtype).at[:IN, :HID].set(
            w1m.astype(compute_dtype))
        w2p = jnp.zeros((HID_p, OUT_p), compute_dtype).at[:HID, :OUT].set(
            w2m.astype(compute_dtype))
        b1p = jnp.zeros((1, HID_p), jnp.float32).at[0, :HID].set(b1f)
        b2p = jnp.zeros((1, OUT_p), jnp.float32).at[0, :OUT].set(b2f)
        params.update(w1=w1p, b1=b1p, w2=w2p, b2=b2p)
    return params


# --------------------------------------------------------------------------- forward
def _batch_tiling(B: int, batch_tile: int):
    """Near-even, sublane(8)-aligned batch tiles; >=2 tiles when B allows (v7x TCs)."""
    batch_tile = max(8, _round_up(batch_tile, 8))
    n_b = max(1, -(-B // batch_tile))        # tiles needed at the requested size
    if n_b == 1 and B > 8:
        n_b = 2                              # keep both v7x TensorCores busy
    TB = _round_up(-(-B // n_b), 8)          # even split, rounded to sublane multiple
    n_b = -(-B // TB)
    return TB, n_b


def encoder_forward(x, params, *, batch_tile=256):
    """x: (B, IN) float. Returns (B, OUT) float32 via the Pallas kernel."""
    IN, HID, OUT = params["dims"]
    cdt = params["compute_dtype"]
    itemsize = jnp.dtype(cdt).itemsize

    B = x.shape[0]
    TB, n_b = _batch_tiling(B, batch_tile)
    B_p = TB * n_b

    if params["fused"]:
        wf, bf = params["wf"], params["bf"]
        IN_p, OUT_p = wf.shape
        operands = (wf, bf)
        kernel = fused_encoder_kernel
        weight_specs = [
            pl.BlockSpec((IN_p, OUT_p), lambda i: (0, 0)),   # Wf (grid-invariant)
            pl.BlockSpec((1, OUT_p), lambda i: (0, 0)),      # bf
        ]
        weight_bytes = IN_p * OUT_p * itemsize + OUT_p * 4
    else:
        w1, b1, w2, b2 = params["w1"], params["b1"], params["w2"], params["b2"]
        IN_p, HID_p = w1.shape
        OUT_p = w2.shape[1]
        operands = (w1, b1, w2, b2)
        kernel = twolayer_encoder_kernel
        weight_specs = [
            pl.BlockSpec((IN_p, HID_p), lambda i: (0, 0)),   # W1m (grid-invariant)
            pl.BlockSpec((1, HID_p), lambda i: (0, 0)),      # b1
            pl.BlockSpec((HID_p, OUT_p), lambda i: (0, 0)),  # W2m (grid-invariant)
            pl.BlockSpec((1, OUT_p), lambda i: (0, 0)),      # b2
        ]
        weight_bytes = ((IN_p * HID_p + HID_p * OUT_p) * itemsize
                        + (HID_p + OUT_p) * 4)

    # Layout plumbing: only pad/cast x when actually needed (extra HBM pass otherwise).
    if (B != B_p) or (x.shape[1] != IN_p) or (x.dtype != cdt):
        xp = jnp.zeros((B_p, IN_p), cdt).at[:B, :IN].set(x.astype(cdt))
    else:
        xp = x

    # VMEM budget: double-buffered x/out tiles + (double-buffered) resident weights.
    vmem_est = 2 * (TB * IN_p * itemsize + TB * OUT_p * 4) + 2 * weight_bytes
    vmem_limit = int(min(max(2 * vmem_est, 32 * 1024 * 1024), 64 * 1024 * 1024))

    out = pl.pallas_call(
        kernel,
        out_shape=jax.ShapeDtypeStruct((B_p, OUT_p), jnp.float32),
        grid_spec=pltpu.PrefetchScalarGridSpec(
            num_scalar_prefetch=0,
            grid=(n_b,),
            in_specs=[pl.BlockSpec((TB, IN_p), lambda i: (i, 0))] + weight_specs,
            out_specs=pl.BlockSpec((TB, OUT_p), lambda i: (i, 0)),  # lane-dense store
        ),
        compiler_params=pltpu.CompilerParams(
            dimension_semantics=("parallel",),       # batch tiles shard across TCs
            vmem_limit_bytes=vmem_limit,
        ),
    )(xp, *operands)

    return out[:B, :OUT]


if __name__ == "__main__":
    # Small shapes implied by the module:
    #   graph_mask:  (HID, IN)  -> first layer  IN -> HID
    #   latent_mask: (OUT, HID) -> second layer HID -> OUT
    B, IN, HID, OUT = 4, 32, 16, 8

    key = jax.random.PRNGKey(0)
    k_x, k_w1, k_b1, k_w2, k_b2, k_m1, k_m2 = jax.random.split(key, 7)

    x = jax.random.normal(k_x, (B, IN), dtype=jnp.float32)

    # Deterministic parameter init (uniform, Linear-style fan-in scaling).
    w1 = jax.random.uniform(k_w1, (HID, IN), jnp.float32, -1.0, 1.0) / jnp.sqrt(IN)
    b1 = jax.random.uniform(k_b1, (HID,), jnp.float32, -1.0, 1.0) / jnp.sqrt(IN)
    w2 = jax.random.uniform(k_w2, (OUT, HID), jnp.float32, -1.0, 1.0) / jnp.sqrt(HID)
    b2 = jax.random.uniform(k_b2, (OUT,), jnp.float32, -1.0, 1.0) / jnp.sqrt(HID)

    # Binary connectivity masks (fixed graph-structure buffers of the module).
    graph_mask = (jax.random.uniform(k_m1, (HID, IN)) < 0.3).astype(jnp.float32)
    latent_mask = (jax.random.uniform(k_m2, (OUT, HID)) < 0.3).astype(jnp.float32)

    # Plain-JAX reference of the masked-linear chain.
    ref = (x @ (w1 * graph_mask).T + b1) @ (w2 * latent_mask).T + b2

    # 1) Fused single-matmul kernel, f32 operands (tight check of the fusion).
    p_f32 = prepare_encoder_params(w1, graph_mask, b1, w2, latent_mask, b2,
                                   compute_dtype=jnp.float32, fuse_layers=True)
    y_f32 = jax.block_until_ready(encoder_forward(x, p_f32))
    assert y_f32.shape == (B, OUT)
    assert jnp.allclose(y_f32, ref, atol=1e-5, rtol=1e-5)

    # 2) Production path: fused + bf16 operands, f32 accumulate (loose check).
    p_bf16 = prepare_encoder_params(w1, graph_mask, b1, w2, latent_mask, b2,
                                    compute_dtype=jnp.bfloat16, fuse_layers=True)
    y_bf16 = jax.block_until_ready(encoder_forward(x, p_bf16))
    assert y_bf16.shape == (B, OUT)
    assert jnp.allclose(y_bf16, ref, atol=3e-2, rtol=3e-2)

    # 3) Unfused two-layer f32 kernel (fallback if real layers have activations).
    p_2l = prepare_encoder_params(w1, graph_mask, b1, w2, latent_mask, b2,
                                  compute_dtype=jnp.float32, fuse_layers=False)
    y_2l = jax.block_until_ready(encoder_forward(x, p_2l))
    assert y_2l.shape == (B, OUT)
    assert jnp.allclose(y_2l, ref, atol=1e-5, rtol=1e-5)

    print("KERNEL_OK")
</pallas_src>

<mosaic_0001>
module attributes {stable_mosaic.version = 11 : i64} {
  func.func @fused_encoder_kernel(%arg0: i32, %arg1: memref<8x128xf32, #tpu.memory_space<vmem>>, %arg2: memref<128x128xf32, #tpu.memory_space<vmem>>, %arg3: memref<1x128xf32, #tpu.memory_space<vmem>>, %arg4: memref<8x128xf32, #tpu.memory_space<vmem>>) attributes {dimension_semantics = [#tpu.dimension_semantics<parallel>], iteration_bounds = array<i64: 1>, scalar_prefetch = 0 : i64, scratch_operands = 0 : i64, tpu.core_type = #tpu.core_type<tc>, window_params = [{transform_indices = @transform_0, window_bounds = array<i64: 8, 128>}, {pipeline_mode = #tpu.pipeline_mode<synchronous>, transform_indices = @transform_1, window_bounds = array<i64: 128, 128>}, {pipeline_mode = #tpu.pipeline_mode<synchronous>, transform_indices = @transform_2, window_bounds = array<i64: 1, 128>}, {transform_indices = @transform_3, window_bounds = array<i64: 8, 128>}]} {
    %c0 = arith.constant 0 : index
    %c0_0 = arith.constant 0 : index
    %0 = vector.load %arg1[%c0, %c0_0] : memref<8x128xf32, #tpu.memory_space<vmem>>, vector<8x128xf32>
    %c0_1 = arith.constant 0 : index
    %c0_2 = arith.constant 0 : index
    %1 = vector.load %arg2[%c0_1, %c0_2] : memref<128x128xf32, #tpu.memory_space<vmem>>, vector<128x128xf32>
    %cst = arith.constant dense<0.000000e+00> : vector<8x128xf32>
    %2 = tpu.matmul %0, %1, %cst {dimension_numbers = #tpu.dot_dimension_numbers<[1], [0], [0], [1], [0, 0, 1, 1], [], []>} : vector<8x128xf32>, vector<128x128xf32>, vector<8x128xf32> -> vector<8x128xf32>
    %c0_3 = arith.constant 0 : index
    %c0_4 = arith.constant 0 : index
    %3 = vector.load %arg3[%c0_3, %c0_4] : memref<1x128xf32, #tpu.memory_space<vmem>>, vector<1x128xf32>
    %4 = vector.broadcast %3 : vector<1x128xf32> to vector<8x128xf32>
    %5 = arith.addf %2, %4 : vector<8x128xf32>
    %c0_5 = arith.constant 0 : index
    %c0_6 = arith.constant 0 : index
    %6 = vector.load %arg4[%c0_5, %c0_6] : memref<8x128xf32, #tpu.memory_space<vmem>>, vector<8x128xf32>
    tpu.vector_store %arg4[%c0_5, %c0_6], %5 {strides = array<i32>} : memref<8x128xf32, #tpu.memory_space<vmem>>, vector<8x128xf32>,
    return
  }
  func.func @transform_0(%arg0: i32) -> (i32, i32) {
    %c0_i32 = arith.constant 0 : i32
    %c0_i32_0 = arith.constant 0 : i32
    return %arg0, %c0_i32 : i32, i32
  }
  func.func @transform_1(%arg0: i32) -> (i32, i32) {
    %c0_i32 = arith.constant 0 : i32
    %c0_i32_0 = arith.constant 0 : i32
    %c0_i32_1 = arith.constant 0 : i32
    return %c0_i32, %c0_i32_0 : i32, i32
  }
  func.func @transform_2(%arg0: i32) -> (i32, i32) {
    %c0_i32 = arith.constant 0 : i32
    %c0_i32_0 = arith.constant 0 : i32
    %c0_i32_1 = arith.constant 0 : i32
    return %c0_i32, %c0_i32_0 : i32, i32
  }
  func.func @transform_3(%arg0: i32) -> (i32, i32) {
    %c0_i32 = arith.constant 0 : i32
    %c0_i32_0 = arith.constant 0 : i32
    return %arg0, %c0_i32 : i32, i32
  }
}

</mosaic_0001>

<llo_original>
// kernel: tpu_custom_call.1
$region0: #{tpu_custom_call.1}
  #allocation0 [shape = 'u32[]', space=smem, size = 0x4, offset = 0x4, fixed_abs, tag = 'smem constant byte address 0x4 - core index']
  #allocation1 [shape = 'u32[144,128]{1,0:T(1,128)}', space=vmem, size = 0x12000, scoped, tag = 'internal scratch']
  %s0 = inlined_call_operand.hbm [shape: f32[8,128], index: 0, kind: input, shape index: {}]
  %s1 = inlined_call_operand.hbm [shape: f32[128,128], index: 1, kind: input, shape index: {}]
  %s2 = inlined_call_operand.vmem [shape: f32[1,128], index: 2, kind: input, shape index: {}]
  %s3 = inlined_call_operand.hbm [shape: f32[8,128], index: 3, kind: output, shape index: {}]
  %s4 = sld [smem:[#allocation0]]
  $region30: #{tpu_custom_call.1} parent=0
    _
  %s6 = ssub.s32 1, %s4
  %s7 = scalar_select 0, %s6, %s4
  $region1: #{tpu_custom_call.1} parent=0
    #allocation2 [shape = 'u8[4096]{0}', space=vmem, size = 0x1000, scoped, tag = 'input window, operand 0, single buffered']
    #allocation3 [shape = 's32[1]{0}', space=sflag, size = 0x4, scoped, tag = 'scoped memory for tpu_custom_call.1']
    #allocation4 [shape = 's32[1]{0}', space=sflag, size = 0x4, scoped, tag = 'scoped memory for tpu_custom_call.1']
    #allocation5 [shape = 'u8[65536]{0}', space=vmem, size = 0x10000, scoped, tag = 'input window, operand 1, single buffered']
    #allocation6 [shape = 's32[1]{0}', space=sflag, size = 0x4, scoped, tag = 'scoped memory for tpu_custom_call.1']
    #allocation7 [shape = 'u8[4096]{0}', space=vmem, size = 0x1000, scoped, tag = 'output window, operand 0, single buffered']
    %8 = vsyncpa [#allocation3], 0
    %9 = vsyncpa [#allocation6], 0
    %10 = vsyncpa [#allocation4], 0
    // Predicated region
    $region2: #{tpu_custom_call.1} parent=1 // pred_check
      _
    $region3: #{tpu_custom_call.1} parent=1 // pred_check_branch
      %12 = sbr.rel (0) target = $region5
    $region4: #{tpu_custom_call.1} parent=1 // pred_region
      %s14 = ssub.s32 128, 128
      %15 = vsyncadd [#allocation3], %s14
      %s17 = sshll.u32 [#allocation2], 4
      %s18 = int_to_ptr.vmem [resolvable:$true] %s17
      %20 = dma.hbm_to_vmem [thread:$0]  %s0, 128, %s18, [#allocation3]
    $region5: #{tpu_custom_call.1} parent=1 // pred_fallthru
      _
    // Predicated region
    $region6: #{tpu_custom_call.1} parent=1 // pred_check
      _
    $region7: #{tpu_custom_call.1} parent=1 // pred_check_branch
      %22 = sbr.rel (0) target = $region9
    $region8: #{tpu_custom_call.1} parent=1 // pred_region
      %s24 = ssub.s32 2048, 2048
      %25 = vsyncadd [#allocation6], %s24
      %s26 = sshll.u32 [#allocation5], 4
      %s27 = int_to_ptr.vmem [resolvable:$true] %s26
      %32 = dma.hbm_to_vmem [thread:$0]  %s1, 2048, %s27, [#allocation6], 128, 128, 8
    $region9: #{tpu_custom_call.1} parent=1 // pred_fallthru
      _
    // Predicated region
    $region10: #{tpu_custom_call.1} parent=1 // pred_check
      _
    $region11: #{tpu_custom_call.1} parent=1 // pred_check_branch
      %34 = sbr.rel (0) target = $region13
    $region12: #{tpu_custom_call.1} parent=1 // pred_region
      _
    $region13: #{tpu_custom_call.1} parent=1 // pred_fallthru
      _
    // Predicated region
    $region14: #{tpu_custom_call.1} parent=1 // pred_check
      _
    $region15: #{tpu_custom_call.1} parent=1 // pred_check_branch
      %36 = sbr.rel (0) target = $region17
    $region16: #{tpu_custom_call.1} parent=1 // pred_region
      %37 = dma.done [#allocation3], 128
    $region17: #{tpu_custom_call.1} parent=1 // pred_fallthru
      _
    // Predicated region
    $region18: #{tpu_custom_call.1} parent=1 // pred_check
      _
    $region19: #{tpu_custom_call.1} parent=1 // pred_check_branch
      %39 = sbr.rel (0) target = $region21
    $region20: #{tpu_custom_call.1} parent=1 // pred_region
      %40 = dma.done [#allocation6], 2048
    $region21: #{tpu_custom_call.1} parent=1 // pred_fallthru
      _
    %v41 = vld [vmem:[#allocation2] sm:$0xff]
    %v42 = vld [vmem:[#allocation5] sm:$0xff]
    %v43 = vld [vmem:[#allocation5 + $0x8] sm:$0xff]
    %v44 = vld [vmem:[#allocation5 + $0x10] sm:$0xff]
    %v45 = vld [vmem:[#allocation5 + $0x18] sm:$0xff]
    %v46 = vld [vmem:[#allocation5 + $0x20] sm:$0xff]
    %v47 = vld [vmem:[#allocation5 + $0x28] sm:$0xff]
    %v48 = vld [vmem:[#allocation5 + $0x30] sm:$0xff]
    %v49 = vld [vmem:[#allocation5 + $0x38] sm:$0xff]
    %v50 = vld [vmem:[#allocation5 + $0x40] sm:$0xff]
    %v51 = vld [vmem:[#allocation5 + $0x48] sm:$0xff]
    %v52 = vld [vmem:[#allocation5 + $0x50] sm:$0xff]
    %v53 = vld [vmem:[#allocation5 + $0x58] sm:$0xff]
    %v54 = vld [vmem:[#allocation5 + $0x60] sm:$0xff]
    %v55 = vld [vmem:[#allocation5 + $0x68] sm:$0xff]
    %v56 = vld [vmem:[#allocation5 + $0x70] sm:$0xff]
    %v57 = vld [vmem:[#allocation5 + $0x78] sm:$0xff]
    %v58 = vld [vmem:[%s2] sm:$0x1]
    %v60 = vlaneseq
    %v61 = vshrl.u32 %v60, 7
    %v62 = vsub.s32 0, %v61
    %v63 = vrot.slane %v58, %v62
    %65 = vmatprep.subr.mxu0 0.0
    %66 = vmatpush1.msra.mxu0 %v57
    %67 = vmatprep.subr.mxu0 0.0
    %68 = vmatpush1.msra.mxu0 %v56
    %69 = vmatprep.subr.mxu0 0.0
    %70 = vmatpush1.msra.mxu0 %v55
    %71 = vmatprep.subr.mxu0 0.0
    %72 = vmatpush1.msra.mxu0 %v54
    %73 = vmatprep.subr.mxu0 0.0
    %74 = vmatpush1.msra.mxu0 %v53
    %75 = vmatprep.subr.mxu0 0.0
    %76 = vmatpush1.msra.mxu0 %v52
    %77 = vmatprep.subr.mxu0 0.0
    %78 = vmatpush1.msra.mxu0 %v51
    %79 = vmatprep.subr.mxu0 0.0
    %80 = vmatpush1.msra.mxu0 %v50
    %81 = vmatprep.subr.mxu0 0.0
    %82 = vmatpush1.msra.mxu0 %v49
    %83 = vmatprep.subr.mxu0 0.0
    %84 = vmatpush1.msra.mxu0 %v48
    %85 = vmatprep.subr.mxu0 0.0
    %86 = vmatpush1.msra.mxu0 %v47
    %87 = vmatprep.subr.mxu0 0.0
    %88 = vmatpush1.msra.mxu0 %v46
    %89 = vmatprep.subr.mxu0 0.0
    %90 = vmatpush1.msra.mxu0 %v45
    %91 = vmatprep.subr.mxu0 0.0
    %92 = vmatpush1.msra.mxu0 %v44
    %93 = vmatprep.subr.mxu0 0.0
    %94 = vmatpush1.msra.mxu0 %v43
    %95 = vmatprep.subr.mxu0 0.0
    %96 = vmatpush1.msra.mxu0 %v42
    %97 = vmatprep.subr.mxu0 0.0
    %98 = vmatpush2.msra.mxu0 0.0
    %99 = vmatprep.subr.mxu0 0.0
    %100 = vmatpush2.msra.mxu0 0.0
    %101 = vmatprep.subr.mxu0 0.0
    %102 = vmatpush2.msra.mxu0 0.0
    %103 = vmatprep.subr.mxu0 0.0
    %104 = vmatpush2.msra.mxu0 0.0
    %105 = vmatprep.subr.mxu0 0.0
    %106 = vmatpush2.msra.mxu0 0.0
    %107 = vmatprep.subr.mxu0 0.0
    %108 = vmatpush2.msra.mxu0 0.0
    %109 = vmatprep.subr.mxu0 0.0
    %110 = vmatpush2.msra.mxu0 0.0
    %111 = vmatprep.subr.mxu0 0.0
    %112 = vmatpush2.msra.mxu0 0.0
    %113 = vmatprep.subr.mxu0 0.0
    %114 = vmatpush2.msra.mxu0 0.0
    %115 = vmatprep.subr.mxu0 0.0
    %116 = vmatpush2.msra.mxu0 0.0
    %117 = vmatprep.subr.mxu0 0.0
    %118 = vmatpush2.msra.mxu0 0.0
    %119 = vmatprep.subr.mxu0 0.0
    %120 = vmatpush2.msra.mxu0 0.0
    %121 = vmatprep.subr.mxu0 0.0
    %122 = vmatpush2.msra.mxu0 0.0
    %123 = vmatprep.subr.mxu0 0.0
    %124 = vmatpush2.msra.mxu0 0.0
    %125 = vmatprep.subr.mxu0 0.0
    %126 = vmatpush2.msra.mxu0 0.0
    %127 = vmatprep.subr.mxu0 0.0
    %128 = vmatpush2.msra.mxu0 0.0
    %129 = vmatprep.mubr.f32.mxu0 0.0
    %130 = vmatmul.mubr.f32.gmra.mxu0 %v41
    %v131 = vpop.f32.mrf.mxu0
    %v132 = vadd.f32 %v63, %v131
    %v133 = vpop.f32.mrf.mxu0
    %134 = vdwg.mxu0
    %135 = vst [vmem:[#allocation7] sm:$0xff] %v132
    // Predicated region
    $region22: #{tpu_custom_call.1} parent=1 // pred_check
      _
    $region23: #{tpu_custom_call.1} parent=1 // pred_check_branch
      %137 = sbr.rel (0) target = $region25
    $region24: #{tpu_custom_call.1} parent=1 // pred_region
      %s139 = ssub.s32 128, 128
      %140 = vsyncadd [#allocation4], %s139
      %s142 = sshll.u32 [#allocation7], 4
      %s143 = int_to_ptr.vmem [resolvable:$true] %s142
      %145 = dma.vmem_to_hbm [thread:$0]  %s143, 128, %s3, [#allocation4]
    $region25: #{tpu_custom_call.1} parent=1 // pred_fallthru
      _
    // Predicated region
    $region26: #{tpu_custom_call.1} parent=1 // pred_check
      _
    $region27: #{tpu_custom_call.1} parent=1 // pred_check_branch
      %147 = sbr.rel (0) target = $region29
    $region28: #{tpu_custom_call.1} parent=1 // pred_region
      %148 = dma.done [#allocation4], 128
    $region29: #{tpu_custom_call.1} parent=1 // pred_fallthru
      _
    %149 = vsyncpa [#allocation3], 1
    %150 = vsyncpa [#allocation6], 1
    %151 = vsyncpa [#allocation4], 1

</llo_original>
